<compile_context>
chip_gen: v7x
topology: tpu7x:2x2x1
jax: 0.10.0
libtpu: 0.0.40
codegen_flags: <defaults>
</compile_context>

<pallas_src>
import numpy as np
import jax
import jax.numpy as jnp
from jax.experimental import pallas as pl
from jax.experimental.pallas import tpu as pltpu

LEAK = 0.1
EPS = 1e-5


def _lrelu(x):
    return jnp.where(x >= 0, x, LEAK * x)


def bn_fold(gamma, beta, mean, var, eps=EPS):
    s = gamma / jnp.sqrt(var + eps)
    return s, beta - mean * s


# ----------------------------- fused Pallas kernel ---------------------------

def _make_decoder_kernel(H, W):
    # 3x3 tap shifts in the flattened (h*W + w) index; t = ky*3 + kx.
    shifts = [(ky - 1) * W + (kx - 1) for ky in range(3) for kx in range(3)]

    def kernel(x_ref, m_ref, wf_ref, bf_ref, w1_ref, b1_ref,
               w2_ref, b2_ref, wu_ref, bu_ref, out_ref, up_ref):
        x = x_ref[0]                                          # (Cin_fuse, HW)

        # fuse: 1x1 conv (+bias) + BN + LeakyReLU; BN scale folded into wf.
        h = _lrelu(jnp.dot(wf_ref[...], x,
                           preferred_element_type=jnp.float32) + bf_ref[...])

        def conv3x3(z, w_r, b_r):
            # taps[t*C + ci, n] = z[ci, n + shift_t]  (zero outside the image)
            # jnp.roll with static shift lowers to lane slices + concat; the
            # wrap-around values are killed by the precomputed mask.
            rolls = [z if s == 0 else jnp.roll(z, -s, axis=1) for s in shifts]
            taps = jnp.concatenate(rolls, axis=0) * m_ref[...]    # (9*C, HW)
            y = jnp.dot(w_r[...], taps, preferred_element_type=jnp.float32)
            return _lrelu(y + b_r[...])

        out = conv3x3(conv3x3(h, w1_ref, b1_ref), w2_ref, b2_ref)
        out_ref[0] = out.astype(out_ref.dtype)

        # up: 2x2 stride-2 transposed conv as one dot; rows = (di, dj, co).
        u = jnp.dot(wu_ref[...], out, preferred_element_type=jnp.float32)
        up_ref[0] = _lrelu(u + bu_ref[...]).astype(up_ref.dtype)

    return kernel


def _tap_masks(H, W, c):
    """(9*c, H*W) f32 validity mask for the 9 shifted taps (zero padding)."""
    HW = H * W
    hh, ww = np.meshgrid(np.arange(H), np.arange(W), indexing="ij")
    rows = []
    for ky in range(3):
        for kx in range(3):
            dy, dx = ky - 1, kx - 1
            valid = ((hh + dy >= 0) & (hh + dy < H) &
                     (ww + dx >= 0) & (ww + dx < W)).astype(np.float32)
            rows.append(np.broadcast_to(valid.reshape(1, HW), (c, HW)))
    return jnp.asarray(np.concatenate(rows, axis=0))


# --------------------------- decoder forward (Pallas) -----------------------

def decoder_forward(params, x_nchw):
    B, cin, H, W = x_nchw.shape
    out_c = params["c1_w"].shape[0]
    c_up = params["up_w"].shape[1]
    HW = H * W

    # ---- fold BN (and the fuse conv bias) into per-stage (weight, shift) ----
    sf, shf = bn_fold(*params["fuse_bn"])
    wf = params["fuse_w"][:, :, 0, 0] * sf[:, None]              # (out_c, cin)
    bf = (sf * params["fuse_b"] + shf).reshape(out_c, 1)

    s1, sh1 = bn_fold(*params["c1_bn"])
    w1 = (jnp.transpose(params["c1_w"], (0, 2, 3, 1)).reshape(out_c, 9 * out_c)
          * s1[:, None])
    b1 = sh1.reshape(out_c, 1)

    s2, sh2 = bn_fold(*params["c2_bn"])
    w2 = (jnp.transpose(params["c2_w"], (0, 2, 3, 1)).reshape(out_c, 9 * out_c)
          * s2[:, None])
    b2 = sh2.reshape(out_c, 1)

    su, shu = bn_fold(*params["up_bn"])
    # torch ConvTranspose2d weight (Cin, Cout, 2, 2) -> rows (di, dj, co)
    wu = (jnp.transpose(params["up_w"], (2, 3, 1, 0)).reshape(4 * c_up, out_c)
          * jnp.tile(su, 4)[:, None])
    bu = jnp.tile(shu, 4).reshape(4 * c_up, 1)

    masks = _tap_masks(H, W, out_c)
    x_flat = x_nchw.reshape(B, cin, HW).astype(jnp.float32)   # NCHW == (C, HW)-major

    kernel = _make_decoder_kernel(H, W)

    def const(shape):
        return pl.BlockSpec(shape, lambda b, _nd=len(shape): (0,) * _nd)

    flops = 2 * B * HW * (out_c * cin + 2 * 9 * out_c * out_c + 4 * c_up * out_c)
    bytes_accessed = 4 * (B * cin * HW + B * (out_c + 4 * c_up) * HW
                          + masks.size + wf.size + bf.size + w1.size + b1.size
                          + w2.size + b2.size + wu.size + bu.size)

    out_k, up_k = pl.pallas_call(
        kernel,
        out_shape=(jax.ShapeDtypeStruct((B, out_c, HW), jnp.float32),
                   jax.ShapeDtypeStruct((B, 4 * c_up, HW), jnp.float32)),
        grid=(B,),
        in_specs=[pl.BlockSpec((1, cin, HW), lambda b: (b, 0, 0)),
                  const(masks.shape), const(wf.shape), const(bf.shape),
                  const(w1.shape), const(b1.shape),
                  const(w2.shape), const(b2.shape),
                  const(wu.shape), const(bu.shape)],
        out_specs=(pl.BlockSpec((1, out_c, HW), lambda b: (b, 0, 0)),
                   pl.BlockSpec((1, 4 * c_up, HW), lambda b: (b, 0, 0))),
        compiler_params=pltpu.CompilerParams(
            dimension_semantics=("parallel",),
            vmem_limit_bytes=32 * 1024 * 1024),
        cost_estimate=pl.CostEstimate(flops=flops, transcendentals=0,
                                      bytes_accessed=bytes_accessed),
    )(x_flat, masks, wf, bf, w1, b1, w2, b2, wu, bu)

    output = out_k.reshape(B, out_c, H, W)                     # already NCHW
    # (b, di, dj, co, h, w) -> (b, co, 2h+di, 2w+dj): tiny 16 KiB interleave.
    up = jnp.transpose(up_k.reshape(B, 2, 2, c_up, H, W),
                       (0, 3, 4, 1, 5, 2)).reshape(B, c_up, 2 * H, 2 * W)
    return up, output


# ------------------------------- parameters ---------------------------------

def _bn_init(key, c):
    k1, k2, k3, k4 = jax.random.split(key, 4)
    gamma = 1.0 + 0.1 * jax.random.normal(k1, (c,), jnp.float32)
    beta = 0.1 * jax.random.normal(k2, (c,), jnp.float32)
    mean = 0.1 * jax.random.normal(k3, (c,), jnp.float32)
    var = jax.random.uniform(k4, (c,), jnp.float32, minval=0.5, maxval=1.5)
    return gamma, beta, mean, var


def init_params(key, out_c, fuse_n):
    ks = jax.random.split(key, 9)
    p = {}
    p['fuse_w'] = 0.2 * jax.random.normal(ks[0], (out_c, out_c * fuse_n, 1, 1), jnp.float32)
    p['fuse_b'] = 0.1 * jax.random.normal(ks[1], (out_c,), jnp.float32)
    p['fuse_bn'] = _bn_init(ks[2], out_c)
    p['c1_w'] = 0.2 * jax.random.normal(ks[3], (out_c, out_c, 3, 3), jnp.float32)
    p['c1_bn'] = _bn_init(ks[4], out_c)
    p['c2_w'] = 0.2 * jax.random.normal(ks[5], (out_c, out_c, 3, 3), jnp.float32)
    p['c2_bn'] = _bn_init(ks[6], out_c)
    p['up_w'] = 0.2 * jax.random.normal(ks[7], (out_c, out_c // 2, 2, 2), jnp.float32)
    p['up_bn'] = _bn_init(ks[8], out_c // 2)
    return p


# ------------------------------- pure-JAX reference -------------------------

def ref_forward(params, x_nchw):
    dn = ('NHWC', 'HWIO', 'NHWC')
    x = jnp.transpose(x_nchw, (0, 2, 3, 1))

    s, sh = bn_fold(*params['fuse_bn'])
    wf = jnp.transpose(params['fuse_w'], (2, 3, 1, 0))
    y = jax.lax.conv_general_dilated(x, wf, (1, 1), 'VALID', dimension_numbers=dn)
    x = _lrelu((y + params['fuse_b']) * s + sh)

    for wk, bnk in (('c1_w', 'c1_bn'), ('c2_w', 'c2_bn')):
        s, sh = bn_fold(*params[bnk])
        wj = jnp.transpose(params[wk], (2, 3, 1, 0))
        y = jax.lax.conv_general_dilated(x, wj, (1, 1), 'SAME', dimension_numbers=dn)
        x = _lrelu(y * s + sh)
    output = x

    s, sh = bn_fold(*params['up_bn'])
    y = jnp.einsum('bijc,codx->bidjxo', output, params['up_w'])
    b, h2, _, w2, _, co = y.shape
    y = y.reshape(b, 2 * h2, 2 * w2, co)
    up = _lrelu(y * s + sh)

    return (jnp.transpose(up, (0, 3, 1, 2)),
            jnp.transpose(output, (0, 3, 1, 2)))


# ------------------------------------ main -----------------------------------

if __name__ == "__main__":
    out_c, fuse_n = 4, 2
    B, H, W = 2, 16, 16

    key = jax.random.PRNGKey(0)
    kx, kp = jax.random.split(key)
    x = jax.random.normal(kx, (B, out_c * fuse_n, H, W), jnp.float32)
    params = init_params(kp, out_c, fuse_n)

    fwd = jax.jit(decoder_forward)
    up_out, output = fwd(params, x)
    jax.block_until_ready((up_out, output))

    assert output.shape == (B, out_c, H, W)
    assert up_out.shape == (B, out_c // 2, 2 * H, 2 * W)

    up_ref, out_ref = ref_forward(params, x)
    assert jnp.allclose(output, out_ref, atol=1e-4, rtol=1e-4)
    assert jnp.allclose(up_out, up_ref, atol=1e-4, rtol=1e-4)

    print("KERNEL_OK")
</pallas_src>

<mosaic_0001>
module attributes {stable_mosaic.version = 11 : i64} {
  func.func @kernel(%arg0: i32, %arg1: memref<1x8x256xf32, #tpu.memory_space<vmem>>, %arg2: memref<36x256xf32, #tpu.memory_space<vmem>>, %arg3: memref<4x8xf32, #tpu.memory_space<vmem>>, %arg4: memref<4x1xf32, #tpu.memory_space<vmem>>, %arg5: memref<4x36xf32, #tpu.memory_space<vmem>>, %arg6: memref<4x1xf32, #tpu.memory_space<vmem>>, %arg7: memref<4x36xf32, #tpu.memory_space<vmem>>, %arg8: memref<4x1xf32, #tpu.memory_space<vmem>>, %arg9: memref<8x4xf32, #tpu.memory_space<vmem>>, %arg10: memref<8x1xf32, #tpu.memory_space<vmem>>, %arg11: memref<1x4x256xf32, #tpu.memory_space<vmem>>, %arg12: memref<1x8x256xf32, #tpu.memory_space<vmem>>) attributes {dimension_semantics = [#tpu.dimension_semantics<parallel>], iteration_bounds = array<i64: 2>, scalar_prefetch = 0 : i64, scratch_operands = 0 : i64, tpu.core_type = #tpu.core_type<tc>, window_params = [{transform_indices = @transform_0, window_bounds = array<i64: 1, 8, 256>}, {pipeline_mode = #tpu.pipeline_mode<synchronous>, transform_indices = @transform_1, window_bounds = array<i64: 36, 256>}, {pipeline_mode = #tpu.pipeline_mode<synchronous>, transform_indices = @transform_2, window_bounds = array<i64: 4, 8>}, {pipeline_mode = #tpu.pipeline_mode<synchronous>, transform_indices = @transform_3, window_bounds = array<i64: 4, 1>}, {pipeline_mode = #tpu.pipeline_mode<synchronous>, transform_indices = @transform_4, window_bounds = array<i64: 4, 36>}, {pipeline_mode = #tpu.pipeline_mode<synchronous>, transform_indices = @transform_5, window_bounds = array<i64: 4, 1>}, {pipeline_mode = #tpu.pipeline_mode<synchronous>, transform_indices = @transform_6, window_bounds = array<i64: 4, 36>}, {pipeline_mode = #tpu.pipeline_mode<synchronous>, transform_indices = @transform_7, window_bounds = array<i64: 4, 1>}, {pipeline_mode = #tpu.pipeline_mode<synchronous>, transform_indices = @transform_8, window_bounds = array<i64: 8, 4>}, {pipeline_mode = #tpu.pipeline_mode<synchronous>, transform_indices = @transform_9, window_bounds = array<i64: 8, 1>}, {transform_indices = @transform_10, window_bounds = array<i64: 1, 4, 256>}, {transform_indices = @transform_11, window_bounds = array<i64: 1, 8, 256>}]} {
    %c0 = arith.constant 0 : index
    %c0_0 = arith.constant 0 : index
    %c0_1 = arith.constant 0 : index
    %0 = vector.load %arg1[%c0, %c0_0, %c0_1] : memref<1x8x256xf32, #tpu.memory_space<vmem>>, vector<1x8x256xf32>
    %1 = vector.shape_cast %0 : vector<1x8x256xf32> to vector<8x256xf32>
    %c0_2 = arith.constant 0 : index
    %c0_3 = arith.constant 0 : index
    %2 = vector.load %arg3[%c0_2, %c0_3] : memref<4x8xf32, #tpu.memory_space<vmem>>, vector<4x8xf32>
    %cst = arith.constant dense<0.000000e+00> : vector<4x256xf32>
    %3 = tpu.matmul %2, %1, %cst {dimension_numbers = #tpu.dot_dimension_numbers<[1], [0], [0], [1], [0, 0, 1, 1], [], []>} : vector<4x8xf32>, vector<8x256xf32>, vector<4x256xf32> -> vector<4x256xf32>
    %c0_4 = arith.constant 0 : index
    %c0_5 = arith.constant 0 : index
    %4 = vector.load %arg4[%c0_4, %c0_5] : memref<4x1xf32, #tpu.memory_space<vmem>>, vector<4x1xf32>
    %5 = vector.broadcast %4 : vector<4x1xf32> to vector<4x256xf32>
    %6 = arith.addf %3, %5 : vector<4x256xf32>
    %cst_6 = arith.constant 0.000000e+00 : f32
    %7 = vector.broadcast %cst_6 : f32 to vector<4x256xf32>
    %8 = arith.cmpf oge, %6, %7 : vector<4x256xf32>
    %cst_7 = arith.constant 1.000000e-01 : f32
    %9 = vector.broadcast %cst_7 : f32 to vector<4x256xf32>
    %10 = arith.mulf %9, %6 : vector<4x256xf32>
    %11 = arith.select %8, %6, %10 : vector<4x256xi1>, vector<4x256xf32>
    %12 = vector.extract_strided_slice %11 {offsets = [0, 239], sizes = [4, 17], strides = [1, 1]} : vector<4x256xf32> to vector<4x17xf32>
    %13 = vector.extract_strided_slice %11 {offsets = [0, 0], sizes = [4, 239], strides = [1, 1]} : vector<4x256xf32> to vector<4x239xf32>
    %14 = tpu.concatenate %12, %13 in 1 : vector<4x17xf32>, vector<4x239xf32> -> vector<4x256xf32>
    %15 = vector.extract_strided_slice %11 {offsets = [0, 240], sizes = [4, 16], strides = [1, 1]} : vector<4x256xf32> to vector<4x16xf32>
    %16 = vector.extract_strided_slice %11 {offsets = [0, 0], sizes = [4, 240], strides = [1, 1]} : vector<4x256xf32> to vector<4x240xf32>
    %17 = tpu.concatenate %15, %16 in 1 : vector<4x16xf32>, vector<4x240xf32> -> vector<4x256xf32>
    %18 = vector.extract_strided_slice %11 {offsets = [0, 241], sizes = [4, 15], strides = [1, 1]} : vector<4x256xf32> to vector<4x15xf32>
    %19 = vector.extract_strided_slice %11 {offsets = [0, 0], sizes = [4, 241], strides = [1, 1]} : vector<4x256xf32> to vector<4x241xf32>
    %20 = tpu.concatenate %18, %19 in 1 : vector<4x15xf32>, vector<4x241xf32> -> vector<4x256xf32>
    %21 = vector.extract_strided_slice %11 {offsets = [0, 255], sizes = [4, 1], strides = [1, 1]} : vector<4x256xf32> to vector<4x1xf32>
    %22 = vector.extract_strided_slice %11 {offsets = [0, 0], sizes = [4, 255], strides = [1, 1]} : vector<4x256xf32> to vector<4x255xf32>
    %23 = tpu.concatenate %21, %22 in 1 : vector<4x1xf32>, vector<4x255xf32> -> vector<4x256xf32>
    %24 = vector.extract_strided_slice %11 {offsets = [0, 1], sizes = [4, 255], strides = [1, 1]} : vector<4x256xf32> to vector<4x255xf32>
    %25 = vector.extract_strided_slice %11 {offsets = [0, 0], sizes = [4, 1], strides = [1, 1]} : vector<4x256xf32> to vector<4x1xf32>
    %26 = tpu.concatenate %24, %25 in 1 : vector<4x255xf32>, vector<4x1xf32> -> vector<4x256xf32>
    %27 = vector.extract_strided_slice %11 {offsets = [0, 15], sizes = [4, 241], strides = [1, 1]} : vector<4x256xf32> to vector<4x241xf32>
    %28 = vector.extract_strided_slice %11 {offsets = [0, 0], sizes = [4, 15], strides = [1, 1]} : vector<4x256xf32> to vector<4x15xf32>
    %29 = tpu.concatenate %27, %28 in 1 : vector<4x241xf32>, vector<4x15xf32> -> vector<4x256xf32>
    %30 = vector.extract_strided_slice %11 {offsets = [0, 16], sizes = [4, 240], strides = [1, 1]} : vector<4x256xf32> to vector<4x240xf32>
    %31 = vector.extract_strided_slice %11 {offsets = [0, 0], sizes = [4, 16], strides = [1, 1]} : vector<4x256xf32> to vector<4x16xf32>
    %32 = tpu.concatenate %30, %31 in 1 : vector<4x240xf32>, vector<4x16xf32> -> vector<4x256xf32>
    %33 = vector.extract_strided_slice %11 {offsets = [0, 17], sizes = [4, 239], strides = [1, 1]} : vector<4x256xf32> to vector<4x239xf32>
    %34 = vector.extract_strided_slice %11 {offsets = [0, 0], sizes = [4, 17], strides = [1, 1]} : vector<4x256xf32> to vector<4x17xf32>
    %35 = tpu.concatenate %33, %34 in 1 : vector<4x239xf32>, vector<4x17xf32> -> vector<4x256xf32>
    %36 = tpu.concatenate %14, %17, %20, %23, %11, %26, %29, %32, %35 in 0 : vector<4x256xf32>, vector<4x256xf32>, vector<4x256xf32>, vector<4x256xf32>, vector<4x256xf32>, vector<4x256xf32>, vector<4x256xf32>, vector<4x256xf32>, vector<4x256xf32> -> vector<36x256xf32>
    %c0_8 = arith.constant 0 : index
    %c0_9 = arith.constant 0 : index
    %37 = vector.load %arg2[%c0_8, %c0_9] : memref<36x256xf32, #tpu.memory_space<vmem>>, vector<36x256xf32>
    %38 = arith.mulf %36, %37 : vector<36x256xf32>
    %c0_10 = arith.constant 0 : index
    %c0_11 = arith.constant 0 : index
    %39 = vector.load %arg5[%c0_10, %c0_11] : memref<4x36xf32, #tpu.memory_space<vmem>>, vector<4x36xf32>
    %cst_12 = arith.constant dense<0.000000e+00> : vector<4x256xf32>
    %40 = tpu.matmul %39, %38, %cst_12 {dimension_numbers = #tpu.dot_dimension_numbers<[1], [0], [0], [1], [0, 0, 1, 1], [], []>} : vector<4x36xf32>, vector<36x256xf32>, vector<4x256xf32> -> vector<4x256xf32>
    %c0_13 = arith.constant 0 : index
    %c0_14 = arith.constant 0 : index
    %41 = vector.load %arg6[%c0_13, %c0_14] : memref<4x1xf32, #tpu.memory_space<vmem>>, vector<4x1xf32>
    %42 = vector.broadcast %41 : vector<4x1xf32> to vector<4x256xf32>
    %43 = arith.addf %40, %42 : vector<4x256xf32>
    %cst_15 = arith.constant 0.000000e+00 : f32
    %44 = vector.broadcast %cst_15 : f32 to vector<4x256xf32>
    %45 = arith.cmpf oge, %43, %44 : vector<4x256xf32>
    %cst_16 = arith.constant 1.000000e-01 : f32
    %46 = vector.broadcast %cst_16 : f32 to vector<4x256xf32>
    %47 = arith.mulf %46, %43 : vector<4x256xf32>
    %48 = arith.select %45, %43, %47 : vector<4x256xi1>, vector<4x256xf32>
    %49 = vector.extract_strided_slice %48 {offsets = [0, 239], sizes = [4, 17], strides = [1, 1]} : vector<4x256xf32> to vector<4x17xf32>
    %50 = vector.extract_strided_slice %48 {offsets = [0, 0], sizes = [4, 239], strides = [1, 1]} : vector<4x256xf32> to vector<4x239xf32>
    %51 = tpu.concatenate %49, %50 in 1 : vector<4x17xf32>, vector<4x239xf32> -> vector<4x256xf32>
    %52 = vector.extract_strided_slice %48 {offsets = [0, 240], sizes = [4, 16], strides = [1, 1]} : vector<4x256xf32> to vector<4x16xf32>
    %53 = vector.extract_strided_slice %48 {offsets = [0, 0], sizes = [4, 240], strides = [1, 1]} : vector<4x256xf32> to vector<4x240xf32>
    %54 = tpu.concatenate %52, %53 in 1 : vector<4x16xf32>, vector<4x240xf32> -> vector<4x256xf32>
    %55 = vector.extract_strided_slice %48 {offsets = [0, 241], sizes = [4, 15], strides = [1, 1]} : vector<4x256xf32> to vector<4x15xf32>
    %56 = vector.extract_strided_slice %48 {offsets = [0, 0], sizes = [4, 241], strides = [1, 1]} : vector<4x256xf32> to vector<4x241xf32>
    %57 = tpu.concatenate %55, %56 in 1 : vector<4x15xf32>, vector<4x241xf32> -> vector<4x256xf32>
    %58 = vector.extract_strided_slice %48 {offsets = [0, 255], sizes = [4, 1], strides = [1, 1]} : vector<4x256xf32> to vector<4x1xf32>
    %59 = vector.extract_strided_slice %48 {offsets = [0, 0], sizes = [4, 255], strides = [1, 1]} : vector<4x256xf32> to vector<4x255xf32>
    %60 = tpu.concatenate %58, %59 in 1 : vector<4x1xf32>, vector<4x255xf32> -> vector<4x256xf32>
    %61 = vector.extract_strided_slice %48 {offsets = [0, 1], sizes = [4, 255], strides = [1, 1]} : vector<4x256xf32> to vector<4x255xf32>
    %62 = vector.extract_strided_slice %48 {offsets = [0, 0], sizes = [4, 1], strides = [1, 1]} : vector<4x256xf32> to vector<4x1xf32>
    %63 = tpu.concatenate %61, %62 in 1 : vector<4x255xf32>, vector<4x1xf32> -> vector<4x256xf32>
    %64 = vector.extract_strided_slice %48 {offsets = [0, 15], sizes = [4, 241], strides = [1, 1]} : vector<4x256xf32> to vector<4x241xf32>
    %65 = vector.extract_strided_slice %48 {offsets = [0, 0], sizes = [4, 15], strides = [1, 1]} : vector<4x256xf32> to vector<4x15xf32>
    %66 = tpu.concatenate %64, %65 in 1 : vector<4x241xf32>, vector<4x15xf32> -> vector<4x256xf32>
    %67 = vector.extract_strided_slice %48 {offsets = [0, 16], sizes = [4, 240], strides = [1, 1]} : vector<4x256xf32> to vector<4x240xf32>
    %68 = vector.extract_strided_slice %48 {offsets = [0, 0], sizes = [4, 16], strides = [1, 1]} : vector<4x256xf32> to vector<4x16xf32>
    %69 = tpu.concatenate %67, %68 in 1 : vector<4x240xf32>, vector<4x16xf32> -> vector<4x256xf32>
    %70 = vector.extract_strided_slice %48 {offsets = [0, 17], sizes = [4, 239], strides = [1, 1]} : vector<4x256xf32> to vector<4x239xf32>
    %71 = vector.extract_strided_slice %48 {offsets = [0, 0], sizes = [4, 17], strides = [1, 1]} : vector<4x256xf32> to vector<4x17xf32>
    %72 = tpu.concatenate %70, %71 in 1 : vector<4x239xf32>, vector<4x17xf32> -> vector<4x256xf32>
    %73 = tpu.concatenate %51, %54, %57, %60, %48, %63, %66, %69, %72 in 0 : vector<4x256xf32>, vector<4x256xf32>, vector<4x256xf32>, vector<4x256xf32>, vector<4x256xf32>, vector<4x256xf32>, vector<4x256xf32>, vector<4x256xf32>, vector<4x256xf32> -> vector<36x256xf32>
    %c0_17 = arith.constant 0 : index
    %c0_18 = arith.constant 0 : index
    %74 = vector.load %arg2[%c0_17, %c0_18] : memref<36x256xf32, #tpu.memory_space<vmem>>, vector<36x256xf32>
    %75 = arith.mulf %73, %74 : vector<36x256xf32>
    %c0_19 = arith.constant 0 : index
    %c0_20 = arith.constant 0 : index
    %76 = vector.load %arg7[%c0_19, %c0_20] : memref<4x36xf32, #tpu.memory_space<vmem>>, vector<4x36xf32>
    %cst_21 = arith.constant dense<0.000000e+00> : vector<4x256xf32>
    %77 = tpu.matmul %76, %75, %cst_21 {dimension_numbers = #tpu.dot_dimension_numbers<[1], [0], [0], [1], [0, 0, 1, 1], [], []>} : vector<4x36xf32>, vector<36x256xf32>, vector<4x256xf32> -> vector<4x256xf32>
    %c0_22 = arith.constant 0 : index
    %c0_23 = arith.constant 0 : index
    %78 = vector.load %arg8[%c0_22, %c0_23] : memref<4x1xf32, #tpu.memory_space<vmem>>, vector<4x1xf32>
    %79 = vector.broadcast %78 : vector<4x1xf32> to vector<4x256xf32>
    %80 = arith.addf %77, %79 : vector<4x256xf32>
    %cst_24 = arith.constant 0.000000e+00 : f32
    %81 = vector.broadcast %cst_24 : f32 to vector<4x256xf32>
    %82 = arith.cmpf oge, %80, %81 : vector<4x256xf32>
    %cst_25 = arith.constant 1.000000e-01 : f32
    %83 = vector.broadcast %cst_25 : f32 to vector<4x256xf32>
    %84 = arith.mulf %83, %80 : vector<4x256xf32>
    %85 = arith.select %82, %80, %84 : vector<4x256xi1>, vector<4x256xf32>
    %c0_26 = arith.constant 0 : index
    %c0_27 = arith.constant 0 : index
    %c0_28 = arith.constant 0 : index
    %86 = vector.load %arg11[%c0_26, %c0_27, %c0_28] : memref<1x4x256xf32, #tpu.memory_space<vmem>>, vector<1x4x256xf32>
    %87 = vector.shape_cast %86 : vector<1x4x256xf32> to vector<4x256xf32>
    %88 = vector.shape_cast %85 : vector<4x256xf32> to vector<1x4x256xf32>
    tpu.vector_store %arg11[%c0_26, %c0_27, %c0_28], %88 {strides = array<i32>} : memref<1x4x256xf32, #tpu.memory_space<vmem>>, vector<1x4x256xf32>,
    %c0_29 = arith.constant 0 : index
    %c0_30 = arith.constant 0 : index
    %89 = vector.load %arg9[%c0_29, %c0_30] : memref<8x4xf32, #tpu.memory_space<vmem>>, vector<8x4xf32>
    %cst_31 = arith.constant dense<0.000000e+00> : vector<8x256xf32>
    %90 = tpu.matmul %89, %85, %cst_31 {dimension_numbers = #tpu.dot_dimension_numbers<[1], [0], [0], [1], [0, 0, 1, 1], [], []>} : vector<8x4xf32>, vector<4x256xf32>, vector<8x256xf32> -> vector<8x256xf32>
    %c0_32 = arith.constant 0 : index
    %c0_33 = arith.constant 0 : index
    %91 = vector.load %arg10[%c0_32, %c0_33] : memref<8x1xf32, #tpu.memory_space<vmem>>, vector<8x1xf32>
    %92 = vector.broadcast %91 : vector<8x1xf32> to vector<8x256xf32>
    %93 = arith.addf %90, %92 : vector<8x256xf32>
    %cst_34 = arith.constant 0.000000e+00 : f32
    %94 = vector.broadcast %cst_34 : f32 to vector<8x256xf32>
    %95 = arith.cmpf oge, %93, %94 : vector<8x256xf32>
    %cst_35 = arith.constant 1.000000e-01 : f32
    %96 = vector.broadcast %cst_35 : f32 to vector<8x256xf32>
    %97 = arith.mulf %96, %93 : vector<8x256xf32>
    %98 = arith.select %95, %93, %97 : vector<8x256xi1>, vector<8x256xf32>
    %c0_36 = arith.constant 0 : index
    %c0_37 = arith.constant 0 : index
    %c0_38 = arith.constant 0 : index
    %99 = vector.load %arg12[%c0_36, %c0_37, %c0_38] : memref<1x8x256xf32, #tpu.memory_space<vmem>>, vector<1x8x256xf32>
    %100 = vector.shape_cast %99 : vector<1x8x256xf32> to vector<8x256xf32>
    %101 = vector.shape_cast %98 : vector<8x256xf32> to vector<1x8x256xf32>
    tpu.vector_store %arg12[%c0_36, %c0_37, %c0_38], %101 {strides = array<i32>} : memref<1x8x256xf32, #tpu.memory_space<vmem>>, vector<1x8x256xf32>,
    return
  }
  func.func @transform_0(%arg0: i32) -> (i32, i32, i32) {
    %c0_i32 = arith.constant 0 : i32
    %c0_i32_0 = arith.constant 0 : i32
    %c0_i32_1 = arith.constant 0 : i32
    return %arg0, %c0_i32, %c0_i32_0 : i32, i32, i32
  }
  func.func @transform_1(%arg0: i32) -> (i32, i32) {
    %c0_i32 = arith.constant 0 : i32
    %c0_i32_0 = arith.constant 0 : i32
    %c0_i32_1 = arith.constant 0 : i32
    return %c0_i32, %c0_i32_0 : i32, i32
  }
  func.func @transform_2(%arg0: i32) -> (i32, i32) {
    %c0_i32 = arith.constant 0 : i32
    %c0_i32_0 = arith.constant 0 : i32
    %c0_i32_1 = arith.constant 0 : i32
    return %c0_i32, %c0_i32_0 : i32, i32
  }
  func.func @transform_3(%arg0: i32) -> (i32, i32) {
    %c0_i32 = arith.constant 0 : i32
    %c0_i32_0 = arith.constant 0 : i32
    %c0_i32_1 = arith.constant 0 : i32
    return %c0_i32, %c0_i32_0 : i32, i32
  }
  func.func @transform_4(%arg0: i32) -> (i32, i32) {
    %c0_i32 = arith.constant 0 : i32
    %c0_i32_0 = arith.constant 0 : i32
    %c0_i32_1 = arith.constant 0 : i32
    return %c0_i32, %c0_i32_0 : i32, i32
  }
  func.func @transform_5(%arg0: i32) -> (i32, i32) {
    %c0_i32 = arith.constant 0 : i32
    %c0_i32_0 = arith.constant 0 : i32
    %c0_i32_1 = arith.constant 0 : i32
    return %c0_i32, %c0_i32_0 : i32, i32
  }
  func.func @transform_6(%arg0: i32) -> (i32, i32) {
    %c0_i32 = arith.constant 0 : i32
    %c0_i32_0 = arith.constant 0 : i32
    %c0_i32_1 = arith.constant 0 : i32
    return %c0_i32, %c0_i32_0 : i32, i32
  }
  func.func @transform_7(%arg0: i32) -> (i32, i32) {
    %c0_i32 = arith.constant 0 : i32
    %c0_i32_0 = arith.constant 0 : i32
    %c0_i32_1 = arith.constant 0 : i32
    return %c0_i32, %c0_i32_0 : i32, i32
  }
  func.func @transform_8(%arg0: i32) -> (i32, i32) {
    %c0_i32 = arith.constant 0 : i32
    %c0_i32_0 = arith.constant 0 : i32
    %c0_i32_1 = arith.constant 0 : i32
    return %c0_i32, %c0_i32_0 : i32, i32
  }
  func.func @transform_9(%arg0: i32) -> (i32, i32) {
    %c0_i32 = arith.constant 0 : i32
    %c0_i32_0 = arith.constant 0 : i32
    %c0_i32_1 = arith.constant 0 : i32
    return %c0_i32, %c0_i32_0 : i32, i32
  }
  func.func @transform_10(%arg0: i32) -> (i32, i32, i32) {
    %c0_i32 = arith.constant 0 : i32
    %c0_i32_0 = arith.constant 0 : i32
    %c0_i32_1 = arith.constant 0 : i32
    return %arg0, %c0_i32, %c0_i32_0 : i32, i32, i32
  }
  func.func @transform_11(%arg0: i32) -> (i32, i32, i32) {
    %c0_i32 = arith.constant 0 : i32
    %c0_i32_0 = arith.constant 0 : i32
    %c0_i32_1 = arith.constant 0 : i32
    return %arg0, %c0_i32, %c0_i32_0 : i32, i32, i32
  }
}

</mosaic_0001>

<llo_original>
// kernel: tile.13
$region0: #{tile.13}
  #allocation0 [shape = 's32[1]{0}', space=sflag, size = 0x4, scoped, tag = 'scoped memory for tile.13']
  %s0 = inlined_call_operand.vmem [shape: f32[2], index: 0, kind: input, shape index: {}]
  %s1 = inlined_call_operand.vmem [shape: f32[4,2], index: 1, kind: output, shape index: {}]
  // Predicated region
  $region2: #{tile.13} parent=0 // pred_check
    _
  $region3: #{tile.13} parent=0 // pred_check_branch
    %3 = sbr.rel (0) target = $region5
  $region4: #{tile.13} parent=0 // pred_region
    _
  $region5: #{tile.13} parent=0 // pred_fallthru
    _
  %v4 = vld [vmem:[%s0] ss:$0 sm:$0xff]
  %5 = vst [vmem:[%s1] sm:$0xf] %v4

// kernel: mul.39
$region0: #{mul.39}
  %s0 = inlined_call_operand.vmem [shape: f32[4,2], index: 0, kind: input, shape index: {}]
  %s1 = inlined_call_operand.vmem [shape: f32[8], index: 1, kind: output, shape index: {}]
  $region1: #{mul.39} parent=0
    #allocation0 [shape = 'u8[4096]{0}', space=vmem, size = 0x1000, scoped, tag = 'scoped mem for output reshape']
    #allocation1 [shape = 'u8[4096]{0}', space=vmem, size = 0x1000, scoped, tag = 'scoped mem for input reshape']
    %s3 = sshllo.u32 0, 4
    %v4 = vld [vmem:[%s0] sm:%s3]
    %5 = vst [vmem:[#allocation1] sm:%s3] %v4
    %v6 = vld [vmem:[#allocation1] sm:$0x1]
    %vm7 = vcmask 15360
    %8 = vst.msk [vmem:[#allocation0] sm:$0x1] %vm7, %v6
    %s9 = scalar_lea.vmem [#allocation1], 3
    %v10 = vld [vmem:[%s9] sm:$0x1]
    %11 = vrot.lane.b32.xlu0 %v10, 6
    %v12 = vpop.permute.xlu0 %11
    %vm13 = vcmask 64560
    %14 = vst.msk [vmem:[#allocation0] sm:$0x1] %vm13, %v12
    %s15 = scalar_lea.vmem [#allocation1], 2
    %v16 = vld [vmem:[%s15] sm:$0x1]
    %17 = vrot.lane.b32.xlu0 %v16, 4
    %v18 = vpop.permute.xlu0 %17
    %vm19 = vcmask 48160
    %20 = vst.msk [vmem:[#allocation0] sm:$0x1] %vm19, %v18
    %s21 = scalar_lea.vmem [#allocation1], 1
    %v22 = vld [vmem:[%s21] sm:$0x1]
    %23 = vrot.lane.b32.xlu0 %v22, 2
    %v24 = vpop.permute.xlu0 %23
    %vm25 = vcmask 31760
    %26 = vst.msk [vmem:[#allocation0] sm:$0x1] %vm25, %v24
    %s28 = sshllo.u32 0, 1
    %v30 = vld [vmem:[#allocation0] sm:%s28]
    %s31 = sshllo.u32 0, 1
    %32 = vst [vmem:[%s1] sm:%s31] %v30

// kernel: tile.0
$region0: #{tile.0}
  %s0 = inlined_call_operand.vmem [shape: f32[4,2], index: 0, kind: input, shape index: {}]
  %s1 = inlined_call_operand.vmem [shape: f32[8,1], index: 1, kind: output, shape index: {}]
  $region1: #{tile.0} parent=0
    #allocation0 [shape = 'u8[4096]{0}', space=vmem, size = 0x1000, scoped, tag = 'scoped mem for input reshape']
    %s3 = sshllo.u32 0, 4
    %v4 = vld [vmem:[%s0] sm:%s3]
    %5 = vst [vmem:[#allocation0] sm:%s3] %v4
    %v6 = vld [vmem:[#allocation0] sm:$0xf]
    %vm7 = vcmask 7168
    %8 = vst.msk [vmem:[%s1] ss:$2 sm:$0xf] %vm7, %v6
    %v9 = vld [vmem:[#allocation0] sm:$0xf]
    %10 = vrot.lane.b32.xlu0 %v9, 127
    %v11 = vpop.permute.xlu0 %10
    %vm12 = vcmask 7168
    %s13 = scalar_lea.vmem %s1, 1
    %14 = vst.msk [vmem:[%s13] ss:$2 sm:$0xf] %vm12, %v11

// kernel: decoder_forward.1
$region0: #{decoder_forward.1}
  #allocation0 [shape = 'u32[]', space=smem, size = 0x4, offset = 0x4, fixed_abs, tag = 'smem constant byte address 0x4 - core index']
  #allocation1 [shape = 'u32[144,128]{1,0:T(1,128)}', space=vmem, size = 0x12000, scoped, tag = 'internal scratch']
  %s0 = inlined_call_operand.vmem [shape: f32[2,8,256], index: 0, kind: input, shape index: {}]
  %s1 = inlined_call_operand.vmem [shape: f32[36,256], index: 1, kind: input, shape index: {}]
  %s2 = inlined_call_operand.vmem [shape: f32[4,8], index: 2, kind: input, shape index: {}]
  %s3 = inlined_call_operand.vmem [shape: f32[4,1], index: 3, kind: input, shape index: {}]
  %s4 = inlined_call_operand.vmem [shape: f32[4,36], index: 4, kind: input, shape index: {}]
  %s5 = inlined_call_operand.vmem [shape: f32[4,1], index: 5, kind: input, shape index: {}]
  %s6 = inlined_call_operand.vmem [shape: f32[4,36], index: 6, kind: input, shape index: {}]
  %s7 = inlined_call_operand.vmem [shape: f32[4,1], index: 7, kind: input, shape index: {}]
  %s8 = inlined_call_operand.vmem [shape: f32[8,4], index: 8, kind: input, shape index: {}]
  %s9 = inlined_call_operand.vmem [shape: f32[8,1], index: 9, kind: input, shape index: {}]
  %s10 = inlined_call_operand.vmem [shape: f32[2,4,256], index: 10, kind: output, shape index: {0}]
  %s11 = inlined_call_operand.vmem [shape: f32[2,8,256], index: 11, kind: output, shape index: {1}]
  %12 = xla_tuple %s10, %s11
  %s13 = sld [smem:[#allocation0]]
  $region81: #{decoder_forward.1} parent=0
    _
  %s15 = ssub.s32 1, %s13
  %s16 = scalar_select 0, %s15, %s13
  loop: start=0, step=1, limit=4
  $region2: #{decoder_forward.1} parent=0 // loop_pre_header
    _
  $region3: #{decoder_forward.1} parent=0 // loop_header
    %s18 = sphi 0, %s22
    %p19 = scmp.ge.s32.totalorder %s18, 4
    %s28 = sphi 0, %s30
    %s31 = sphi 0, %s28
    %s32 = sphi 0, %s31
    %s48 = sphi 0, %s32
    %s52 = sphi 0, %s52
    %s54 = sphi 0, %s52
    %s55 = sphi 0, %s54
    %s69 = sphi 0, %s55
    %s73 = sphi 0, %s73
    %s75 = sphi 0, %s73
    %s76 = sphi 0, %s75
    %s90 = sphi 0, %s76
    %s94 = sphi 0, %s94
    %s96 = sphi 0, %s94
    %s97 = sphi 0, %s96
    %s111 = sphi 0, %s97
    %s115 = sphi 0, %s115
    %s117 = sphi 0, %s115
    %s118 = sphi 0, %s117
    %s132 = sphi 0, %s118
    %s136 = sphi 0, %s136
    %s138 = sphi 0, %s136
    %s139 = sphi 0, %s138
    %s153 = sphi 0, %s139
    %s157 = sphi 0, %s157
    %s159 = sphi 0, %s157
    %s160 = sphi 0, %s159
    %s174 = sphi 0, %s160
    %s178 = sphi 0, %s178
    %s180 = sphi 0, %s178
    %s181 = sphi 0, %s180
    %s195 = sphi 0, %s181
    %s199 = sphi 0, %s199
    %s201 = sphi 0, %s199
    %s202 = sphi 0, %s201
    %s216 = sphi 0, %s202
    %s220 = sphi 0, %s220
    %s222 = sphi 0, %s220
    %s223 = sphi 0, %s222
    %s237 = sphi 0, %s223
    %s243 = sphi 0, %s245
    %s246 = sphi 0, %s243
    %s247 = sphi 0, %s246
    %s263 = sphi 0, %s247
    %s269 = sphi 0, %s271
    %s272 = sphi 0, %s269
    %s273 = sphi 0, %s272
    %s289 = sphi 0, %s273
  $region4: #{decoder_forward.1} parent=0 // loop_header_branch
    %21 = sbr.rel (%p19) target = $region8
  $region5: #{decoder_forward.1} parent=0 // loop_body
    %s23 = ssub.s32 %s18, 1
    %s24 = ssub.s32 %s18, 2
    %s25 = sadd.s32 %s18, 1
    %s26 = ssub.s32 %s18, %s25
    %p27 = scmp.eq.s32.totalorder %s26, 0
    %s29 = sadd.s32 %s28, 1
    %s30 = scalar_select %p27, %s28, %s29
    %p33 = pneg %p27
    %p34 = scmp.eq.s32.totalorder %s18, 1
    %p35 = por %p33, %p34
    %p36 = scmp.ne.s32.totalorder %s28, %s31
    %p37 = scmp.eq.s32.totalorder %s18, 0
    %p38 = por %p36, %p37
    %p39 = scmp.ne.s32.totalorder %s28, %s31
    %p40 = scmp.eq.s32.totalorder %s23, 1
    %p41 = por %p39, %p40
    %p42 = scmp.ne.s32.totalorder %s31, %s32
    %p43 = scmp.eq.s32.totalorder %s23, 0
    %p44 = por %p42, %p43
    %p45 = scmp.ne.s32.totalorder %s31, %s32
    %p46 = scmp.eq.s32.totalorder %s24, 1
    %p47 = por %p45, %p46
    %p49 = scmp.ne.s32.totalorder %s32, %s48
    %p50 = scmp.eq.s32.totalorder %s24, 0
    %p51 = por %p49, %p50
    %s53 = sadd.s32 %s52, 1
    %p56 = scmp.eq.s32.totalorder %s18, 1
    %p57 = scmp.ne.s32.totalorder %s52, %s54
    %p58 = scmp.eq.s32.totalorder %s18, 0
    %p59 = por %p57, %p58
    %p60 = scmp.ne.s32.totalorder %s52, %s54
    %p61 = scmp.eq.s32.totalorder %s23, 1
    %p62 = por %p60, %p61
    %p63 = scmp.ne.s32.totalorder %s54, %s55
    %p64 = scmp.eq.s32.totalorder %s23, 0
    %p65 = por %p63, %p64
    %p66 = scmp.ne.s32.totalorder %s54, %s55
    %p67 = scmp.eq.s32.totalorder %s24, 1
    %p68 = por %p66, %p67
    %p70 = scmp.ne.s32.totalorder %s55, %s69
    %p71 = scmp.eq.s32.totalorder %s24, 0
    %p72 = por %p70, %p71
    %s74 = sadd.s32 %s73, 1
    %p77 = scmp.eq.s32.totalorder %s18, 1
    %p78 = scmp.ne.s32.totalorder %s73, %s75
    %p79 = scmp.eq.s32.totalorder %s18, 0
    %p80 = por %p78, %p79
    %p81 = scmp.ne.s32.totalorder %s73, %s75
    %p82 = scmp.eq.s32.totalorder %s23, 1
    %p83 = por %p81, %p82
    %p84 = scmp.ne.s32.totalorder %s75, %s76
    %p85 = scmp.eq.s32.totalorder %s23, 0
    %p86 = por %p84, %p85
    %p87 = scmp.ne.s32.totalorder %s75, %s76
    %p88 = scmp.eq.s32.totalorder %s24, 1
    %p89 = por %p87, %p88
    %p91 = scmp.ne.s32.totalorder %s76, %s90
    %p92 = scmp.eq.s32.totalorder %s24, 0
    %p93 = por %p91, %p92
    %s95 = sadd.s32 %s94, 1
    %p98 = scmp.eq.s32.totalorder %s18, 1
    %p99 = scmp.ne.s32.totalorder %s94, %s96
    %p100 = scmp.eq.s32.totalorder %s18, 0
    %p101 = por %p99, %p100
    %p102 = scmp.ne.s32.totalorder %s94, %s96
    %p103 = scmp.eq.s32.totalorder %s23, 1
    %p104 = por %p102, %p103
    %p105 = scmp.ne.s32.totalorder %s96, %s97
    %p106 = scmp.eq.s32.totalorder %s23, 0
    %p107 = por %p105, %p106
    %p108 = scmp.ne.s32.totalorder %s96, %s97
    %p109 = scmp.eq.s32.totalorder %s24, 1
    %p110 = por %p108, %p109
    %p112 = scmp.ne.s32.totalorder %s97, %s111
    %p113 = scmp.eq.s32.totalorder %s24, 0
    %p114 = por %p112, %p113
    %s116 = sadd.s32 %s115, 1
    %p119 = scmp.eq.s32.totalorder %s18, 1
    %p120 = scmp.ne.s32.totalorder %s115, %s117
    %p121 = scmp.eq.s32.totalorder %s18, 0
    %p122 = por %p120, %p121
    %p123 = scmp.ne.s32.totalorder %s115, %s117
    %p124 = scmp.eq.s32.totalorder %s23, 1
    %p125 = por %p123, %p124
    %p126 = scmp.ne.s32.totalorder %s117, %s118
    %p127 = scmp.eq.s32.totalorder %s23, 0
    %p128 = por %p126, %p127
    %p129 = scmp.ne.s32.totalorder %s117, %s118
    %p130 = scmp.eq.s32.totalorder %s24, 1
    %p131 = por %p129, %p130
    %p133 = scmp.ne.s32.totalorder %s118, %s132
    %p134 = scmp.eq.s32.totalorder %s24, 0
    %p135 = por %p133, %p134
    %s137 = sadd.s32 %s136, 1
    %p140 = scmp.eq.s32.totalorder %s18, 1
    %p141 = scmp.ne.s32.totalorder %s136, %s138
    %p142 = scmp.eq.s32.totalorder %s18, 0
    %p143 = por %p141, %p142
    %p144 = scmp.ne.s32.totalorder %s136, %s138
    %p145 = scmp.eq.s32.totalorder %s23, 1
    %p146 = por %p144, %p145
    %p147 = scmp.ne.s32.totalorder %s138, %s139
    %p148 = scmp.eq.s32.totalorder %s23, 0
    %p149 = por %p147, %p148
    %p150 = scmp.ne.s32.totalorder %s138, %s139
    %p151 = scmp.eq.s32.totalorder %s24, 1
    %p152 = por %p150, %p151
    %p154 = scmp.ne.s32.totalorder %s139, %s153
    %p155 = scmp.eq.s32.totalorder %s24, 0
    %p156 = por %p154, %p155
    %s158 = sadd.s32 %s157, 1
    %p161 = scmp.eq.s32.totalorder %s18, 1
    %p162 = scmp.ne.s32.totalorder %s157, %s159
    %p163 = scmp.eq.s32.totalorder %s18, 0
    %p164 = por %p162, %p163
    %p165 = scmp.ne.s32.totalorder %s157, %s159
    %p166 = scmp.eq.s32.totalorder %s23, 1
    %p167 = por %p165, %p166
    %p168 = scmp.ne.s32.totalorder %s159, %s160
    %p169 = scmp.eq.s32.totalorder %s23, 0
    %p170 = por %p168, %p169
    %p171 = scmp.ne.s32.totalorder %s159, %s160
    %p172 = scmp.eq.s32.totalorder %s24, 1
    %p173 = por %p171, %p172
    %p175 = scmp.ne.s32.totalorder %s160, %s174
    %p176 = scmp.eq.s32.totalorder %s24, 0
    %p177 = por %p175, %p176
    %s179 = sadd.s32 %s178, 1
    %p182 = scmp.eq.s32.totalorder %s18, 1
    %p183 = scmp.ne.s32.totalorder %s178, %s180
    %p184 = scmp.eq.s32.totalorder %s18, 0
    %p185 = por %p183, %p184
    %p186 = scmp.ne.s32.totalorder %s178, %s180
    %p187 = scmp.eq.s32.totalorder %s23, 1
    %p188 = por %p186, %p187
    %p189 = scmp.ne.s32.totalorder %s180, %s181
    %p190 = scmp.eq.s32.totalorder %s23, 0
    %p191 = por %p189, %p190
    %p192 = scmp.ne.s32.totalorder %s180, %s181
    %p193 = scmp.eq.s32.totalorder %s24, 1
    %p194 = por %p192, %p193
    %p196 = scmp.ne.s32.totalorder %s181, %s195
    %p197 = scmp.eq.s32.totalorder %s24, 0
    %p198 = por %p196, %p197
    %s200 = sadd.s32 %s199, 1
    %p203 = scmp.eq.s32.totalorder %s18, 1
    %p204 = scmp.ne.s32.totalorder %s199, %s201
    %p205 = scmp.eq.s32.totalorder %s18, 0
    %p206 = por %p204, %p205
    %p207 = scmp.ne.s32.totalorder %s199, %s201
    %p208 = scmp.eq.s32.totalorder %s23, 1
    %p209 = por %p207, %p208
    %p210 = scmp.ne.s32.totalorder %s201, %s202
    %p211 = scmp.eq.s32.totalorder %s23, 0
    %p212 = por %p210, %p211
    %p213 = scmp.ne.s32.totalorder %s201, %s202
    %p214 = scmp.eq.s32.totalorder %s24, 1
    %p215 = por %p213, %p214
    %p217 = scmp.ne.s32.totalorder %s202, %s216
    %p218 = scmp.eq.s32.totalorder %s24, 0
    %p219 = por %p217, %p218
    %s221 = sadd.s32 %s220, 1
    %p224 = scmp.eq.s32.totalorder %s18, 1
    %p225 = scmp.ne.s32.totalorder %s220, %s222
    %p226 = scmp.eq.s32.totalorder %s18, 0
    %p227 = por %p225, %p226
    %p228 = scmp.ne.s32.totalorder %s220, %s222
    %p229 = scmp.eq.s32.totalorder %s23, 1
    %p230 = por %p228, %p229
    %p231 = scmp.ne.s32.totalorder %s222, %s223
    %p232 = scmp.eq.s32.totalorder %s23, 0
    %p233 = por %p231, %p232
    %p234 = scmp.ne.s32.totalorder %s222, %s223
    %p235 = scmp.eq.s32.totalorder %s24, 1
    %p236 = por %p234, %p235
    %p238 = scmp.ne.s32.totalorder %s223, %s237
    %p239 = scmp.eq.s32.totalorder %s24, 0
    %p240 = por %p238, %p239
    %s241 = ssub.s32 %s18, %s25
    %p242 = scmp.eq.s32.totalorder %s241, 0
    %s244 = sadd.s32 %s243, 1
    %s245 = scalar_select %p242, %s243, %s244
    %p248 = pneg %p242
    %p249 = scmp.eq.s32.totalorder %s18, 1
    %p250 = por %p248, %p249
    %p251 = scmp.ne.s32.totalorder %s243, %s246
    %p252 = scmp.eq.s32.totalorder %s18, 0
    %p253 = por %p251, %p252
    %p254 = scmp.ne.s32.totalorder %s243, %s246
    %p255 = scmp.eq.s32.totalorder %s23, 1
    %p256 = por %p254, %p255
    %p257 = scmp.ne.s32.totalorder %s246, %s247
    %p258 = scmp.eq.s32.totalorder %s23, 0
    %p259 = por %p257, %p258
    %p260 = scmp.ne.s32.totalorder %s246, %s247
    %p261 = scmp.eq.s32.totalorder %s24, 1
    %p262 = por %p260, %p261
    %p264 = scmp.ne.s32.totalorder %s247, %s263
    %p265 = scmp.eq.s32.totalorder %s24, 0
    %p266 = por %p264, %p265
    %s267 = ssub.s32 %s18, %s25
    %p268 = scmp.eq.s32.totalorder %s267, 0
    %s270 = sadd.s32 %s269, 1
    %s271 = scalar_select %p268, %s269, %s270
    %p274 = pneg %p268
    %p275 = scmp.eq.s32.totalorder %s18, 1
    %p276 = por %p274, %p275
    %p277 = scmp.ne.s32.totalorder %s269, %s272
    %p278 = scmp.eq.s32.totalorder %s18, 0
    %p279 = por %p277, %p278
    %p280 = scmp.ne.s32.totalorder %s269, %s272
    %p281 = scmp.eq.s32.totalorder %s23, 1
    %p282 = por %p280, %p281
    %p283 = scmp.ne.s32.totalorder %s272, %s273
    %p284 = scmp.eq.s32.totalorder %s23, 0
    %p285 = por %p283, %p284
    %p286 = scmp.ne.s32.totalorder %s272, %s273
    %p287 = scmp.eq.s32.totalorder %s24, 1
    %p288 = por %p286, %p287
    %p290 = scmp.ne.s32.totalorder %s273, %s289
    %p291 = scmp.eq.s32.totalorder %s24, 0
    %p292 = por %p290, %p291
    %p293 = scmp.le.s32.totalorder 1, %s18
    %p294 = scmp.lt.s32.totalorder %s18, 3
    %p295 = pnand %p293, %p294
    %p296 = pneg %p295
    // Predicated region
    $region9: #{decoder_forward.1} parent=5 // pred_check
      _
    $region10: #{decoder_forward.1} parent=5 // pred_check_branch
      %298 = sbr.rel (%p295) target = $region12
    $region11: #{decoder_forward.1} parent=5 // pred_region
      %s299 = ssub.s32 %s18, 1
      // Predicated region
      $region13: #{decoder_forward.1} parent=11 // pred_check
        %p300 = pneg %p65
      $region14: #{decoder_forward.1} parent=11 // pred_check_branch
        %302 = sbr.rel (%p300) target = $region16
      $region15: #{decoder_forward.1} parent=11 // pred_region
        _
      $region16: #{decoder_forward.1} parent=11 // pred_fallthru
        _
      // Predicated region
      $region17: #{decoder_forward.1} parent=11 // pred_check
        %p303 = pneg %p86
      $region18: #{decoder_forward.1} parent=11 // pred_check_branch
        %305 = sbr.rel (%p303) target = $region20
      $region19: #{decoder_forward.1} parent=11 // pred_region
        _
      $region20: #{decoder_forward.1} parent=11 // pred_fallthru
        _
      // Predicated region
      $region21: #{decoder_forward.1} parent=11 // pred_check
        %p306 = pneg %p107
      $region22: #{decoder_forward.1} parent=11 // pred_check_branch
        %308 = sbr.rel (%p306) target = $region24
      $region23: #{decoder_forward.1} parent=11 // pred_region
        _
      $region24: #{decoder_forward.1} parent=11 // pred_fallthru
        _
      // Predicated region
      $region25: #{decoder_forward.1} parent=11 // pred_check
        %p309 = pneg %p128
      $region26: #{decoder_forward.1} parent=11 // pred_check_branch
        %311 = sbr.rel (%p309) target = $region28
      $region27: #{decoder_forward.1} parent=11 // pred_region
        _
      $region28: #{decoder_forward.1} parent=11 // pred_fallthru
        _
      // Predicated region
      $region29: #{decoder_forward.1} parent=11 // pred_check
        %p312 = pneg %p149
      $region30: #{decoder_forward.1} parent=11 // pred_check_branch
        %314 = sbr.rel (%p312) target = $region32
      $region31: #{decoder_forward.1} parent=11 // pred_region
        _
      $region32: #{decoder_forward.1} parent=11 // pred_fallthru
        _
      // Predicated region
      $region33: #{decoder_forward.1} parent=11 // pred_check
        %p315 = pneg %p170
      $region34: #{decoder_forward.1} parent=11 // pred_check_branch
        %317 = sbr.rel (%p315) target = $region36
      $region35: #{decoder_forward.1} parent=11 // pred_region
        _
      $region36: #{decoder_forward.1} parent=11 // pred_fallthru
        _
      // Predicated region
      $region37: #{decoder_forward.1} parent=11 // pred_check
        %p318 = pneg %p191
      $region38: #{decoder_forward.1} parent=11 // pred_check_branch
        %320 = sbr.rel (%p318) target = $region40
      $region39: #{decoder_forward.1} parent=11 // pred_region
        _
      $region40: #{decoder_forward.1} parent=11 // pred_fallthru
        _
      // Predicated region
      $region41: #{decoder_forward.1} parent=11 // pred_check
        %p321 = pneg %p212
      $region42: #{decoder_forward.1} parent=11 // pred_check_branch
        %323 = sbr.rel (%p321) target = $region44
      $region43: #{decoder_forward.1} parent=11 // pred_region
        _
      $region44: #{decoder_forward.1} parent=11 // pred_fallthru
        _
      // Predicated region
      $region45: #{decoder_forward.1} parent=11 // pred_check
        %p324 = pneg %p233
      $region46: #{decoder_forward.1} parent=11 // pred_check_branch
        %326 = sbr.rel (%p324) target = $region48
      $region47: #{decoder_forward.1} parent=11 // pred_region
        _
      $region48: #{decoder_forward.1} parent=11 // pred_fallthru
        _
    $region12: #{decoder_forward.1} parent=5 // pred_fallthru
      _
    %p327 = scmp.lt.s32.totalorder %s18, 2
    // Predicated region
    $region49: #{decoder_forward.1} parent=5 // pred_check
      %p328 = pneg %p327
    $region50: #{decoder_forward.1} parent=5 // pred_check_branch
      %330 = sbr.rel (%p328) target = $region52
    $region51: #{decoder_forward.1} parent=5 // pred_region
      // Predicated region
      $region53: #{decoder_forward.1} parent=51 // pred_check
        %p331 = pneg %p38
      $region54: #{decoder_forward.1} parent=51 // pred_check_branch
        %333 = sbr.rel (%p331) target = $region56
      $region55: #{decoder_forward.1} parent=51 // pred_region
        %p334 = scmp.lt.s32.totalorder %s18, 1
        %s335 = scalar_select %p334, %s18, 1
        %s336 = smul.addr %s335, 2
        %s337 = smul.addr %s336, 8
        %s338 = scalar_lea.vmem %s0, %s337
      $region56: #{decoder_forward.1} parent=51 // pred_fallthru
        _
    $region52: #{decoder_forward.1} parent=5 // pred_fallthru
      _
    %p339 = scmp.le.s32.totalorder 1, %s18
    %p340 = scmp.lt.s32.totalorder %s18, 3
    %p341 = pnand %p339, %p340
    %p342 = pneg %p341
    // Predicated region
    $region57: #{decoder_forward.1} parent=5 // pred_check
      _
    $region58: #{decoder_forward.1} parent=5 // pred_check_branch
      %344 = sbr.rel (%p341) target = $region60
    $region59: #{decoder_forward.1} parent=5 // pred_region
      %s345 = ssub.s32 %s18, 1
      %p346 = scmp.lt.s32.totalorder %s23, 1
      %s347 = scalar_select %p346, %s23, 1
      %s348 = smul.addr %s347, 2
      %s349 = smul.addr %s348, 8
      %s350 = scalar_lea.vmem %s0, %s349
      %p351 = pneg %p44
      %p352 = pneg %p41
      %p353 = pneg %p65
      %p354 = pneg %p62
      %p355 = pneg %p86
      %p356 = pneg %p83
      %p357 = pneg %p107
      %p358 = pneg %p104
      %p359 = pneg %p128
      %p360 = pneg %p125
      %p361 = pneg %p149
      %p362 = pneg %p146
      %p363 = pneg %p170
      %p364 = pneg %p167
      %p365 = pneg %p191
      %p366 = pneg %p188
      %p367 = pneg %p212
      %p368 = pneg %p209
      %p369 = pneg %p233
      %p370 = pneg %p230
      %p371 = pneg %p259
      %p372 = pneg %p256
      %p373 = scmp.lt.s32.totalorder %s23, 1
      %s374 = scalar_select %p373, %s23, 1
      %s375 = smul.addr %s374, 2
      %s376 = smul.addr %s375, 4
      %s377 = scalar_lea.vmem %s10, %s376
      %p378 = pneg %p285
      %p379 = pneg %p282
      %p380 = scmp.lt.s32.totalorder %s23, 1
      %s381 = scalar_select %p380, %s23, 1
      %s382 = smul.addr %s381, 2
      %s383 = smul.addr %s382, 8
      %s384 = scalar_lea.vmem %s11, %s383
      %p385 = scmp.lt.s32.totalorder %s23, 1
      %s386 = scalar_select %p385, %s23, 1
      %s387 = smul.addr %s386, 2
      %s388 = smul.addr %s387, 8
      %s389 = scalar_lea.vmem %s0, %s388
      %p390 = scmp.lt.s32.totalorder %s23, 1
      %s391 = scalar_select %p390, %s23, 1
      %s392 = smul.addr %s391, 2
      %s393 = smul.addr %s392, 4
      %s394 = scalar_lea.vmem %s10, %s393
      %p395 = scmp.lt.s32.totalorder %s23, 1
      %s396 = scalar_select %p395, %s23, 1
      %s397 = smul.addr %s396, 2
      %s398 = smul.addr %s397, 8
      %s399 = scalar_lea.vmem %s11, %s398
      %v400 = vld [vmem:[%s389] sm:$0xff]
      %v401 = vld [vmem:[%s389 + $0x8] sm:$0xff]
      %v402 = vld [vmem:[%s2] sm:$0xf]
      %v403 = vld [vmem:[%s3] sm:$0xf]
      %405 = vset.pattern.permute.xlu0 0
      %406 = vperm.xlu0 %405, %v403
      %v407 = vpop.permute.xlu0 %406
      %vm409 = vcmask 64512
      %v411 = vsel %vm409, %v402, 0
      %413 = vmatprep.subr.mxu0 %v401
      %414 = vmatpush1.msra.mxu0 %v400
      %415 = vmatprep.subr.mxu0 0.0
      %416 = vmatpush1.msra.mxu0 0.0
      %417 = vmatprep.subr.mxu0 0.0
      %418 = vmatpush1.msra.mxu0 0.0
      %419 = vmatprep.subr.mxu0 0.0
      %420 = vmatpush1.msra.mxu0 0.0
      %421 = vmatprep.subr.mxu0 0.0
      %422 = vmatpush1.msra.mxu0 0.0
      %423 = vmatprep.subr.mxu0 0.0
      %424 = vmatpush1.msra.mxu0 0.0
      %425 = vmatprep.subr.mxu0 0.0
      %426 = vmatpush1.msra.mxu0 0.0
      %427 = vmatprep.subr.mxu0 0.0
      %428 = vmatpush1.msra.mxu0 0.0
      %429 = vmatprep.subr.mxu0 0.0
      %430 = vmatpush1.msra.mxu0 0.0
      %431 = vmatprep.subr.mxu0 0.0
      %432 = vmatpush1.msra.mxu0 0.0
      %433 = vmatprep.subr.mxu0 0.0
      %434 = vmatpush1.msra.mxu0 0.0
      %435 = vmatprep.subr.mxu0 0.0
      %436 = vmatpush1.msra.mxu0 0.0
      %437 = vmatprep.subr.mxu0 0.0
      %438 = vmatpush1.msra.mxu0 0.0
      %439 = vmatprep.subr.mxu0 0.0
      %440 = vmatpush1.msra.mxu0 0.0
      %441 = vmatprep.subr.mxu0 0.0
      %442 = vmatpush1.msra.mxu0 0.0
      %443 = vmatprep.subr.mxu0 0.0
      %444 = vmatpush1.msra.mxu0 0.0
      %445 = vmatprep.subr.mxu0 0.0
      %446 = vmatpush1.msra.mxu0 0.0
      %447 = vmatprep.subr.mxu0 0.0
      %448 = vmatpush1.msra.mxu0 0.0
      %449 = vmatprep.subr.mxu0 0.0
      %450 = vmatpush1.msra.mxu0 0.0
      %451 = vmatprep.subr.mxu0 0.0
      %452 = vmatpush1.msra.mxu0 0.0
      %453 = vmatprep.subr.mxu0 0.0
      %454 = vmatpush1.msra.mxu0 0.0
      %455 = vmatprep.subr.mxu0 0.0
      %456 = vmatpush1.msra.mxu0 0.0
      %457 = vmatprep.subr.mxu0 0.0
      %458 = vmatpush1.msra.mxu0 0.0
      %459 = vmatprep.subr.mxu0 0.0
      %460 = vmatpush1.msra.mxu0 0.0
      %461 = vmatprep.subr.mxu0 0.0
      %462 = vmatpush1.msra.mxu0 0.0
      %463 = vmatprep.subr.mxu0 0.0
      %464 = vmatpush1.msra.mxu0 0.0
      %465 = vmatprep.subr.mxu0 0.0
      %466 = vmatpush1.msra.mxu0 0.0
      %467 = vmatprep.subr.mxu0 0.0
      %468 = vmatpush1.msra.mxu0 0.0
      %469 = vmatprep.subr.mxu0 0.0
      %470 = vmatpush1.msra.mxu0 0.0
      %471 = vmatprep.subr.mxu0 0.0
      %472 = vmatpush1.msra.mxu0 0.0
      %473 = vmatprep.subr.mxu0 0.0
      %474 = vmatpush1.msra.mxu0 0.0
      %475 = vmatprep.subr.mxu0 0.0
      %476 = vmatpush1.msra.mxu0 0.0
      %477 = vmatprep.mubr.f32.mxu0 0.0
      %478 = vmatmul.mubr.f32.gmra.mrb[0].mxu0 %v411
      %v479 = vpop.f32.mrb[0].mxu0
      %v480 = vadd.f32 %v407, %v479
      %v481 = vpop.f32.mrb[0].mxu0
      %v482 = vadd.f32 %v407, %v481
      %483 = vdwg.mxu0
      %vm484 = vcmp.ge.f32.partialorder %v480, 0.0
      %vm485 = vcmp.ge.f32.partialorder %v482, 0.0
      %v486 = vmul.f32 %v480, 0.1
      %v487 = vmul.f32 %v482, 0.1
      %v488 = vsel %vm484, %v480, %v486
      %v489 = vsel %vm485, %v482, %v487
      %491 = vrot.lane.b32.xlu0 %v489, 17
      %v492 = vpop.permute.xlu0 %491
      %495 = vrot.lane.b32.xlu0 %v488, 17
      %v496 = vpop.permute.xlu0 %495
      %vm497 = vcmask 138240
      %v498 = vsel %vm497, %v496, %v492
      %v501 = vsel %vm497, %v492, %v496
      %502 = vrot.lane.b32.xlu0 %v489, 16
      %v503 = vpop.permute.xlu0 %502
      %505 = vrot.lane.b32.xlu0 %v488, 16
      %v506 = vpop.permute.xlu0 %505
      %vm507 = vcmask 130048
      %v508 = vsel %vm507, %v506, %v503
      %v510 = vsel %vm507, %v503, %v506
      %511 = vrot.lane.b32.xlu0 %v489, 15
      %v512 = vpop.permute.xlu0 %511
      %514 = vrot.lane.b32.xlu0 %v488, 15
      %v515 = vpop.permute.xlu0 %514
      %vm516 = vcmask 121856
      %v517 = vsel %vm516, %v515, %v512
      %v520 = vsel %vm516, %v512, %v515
      %521 = vrot.lane.b32.xlu0 %v489, 1
      %v522 = vpop.permute.xlu0 %521
      %524 = vrot.lane.b32.xlu0 %v488, 1
      %v525 = vpop.permute.xlu0 %524
      %vm526 = vcmask 7168
      %v527 = vsel %vm526, %v525, %v522
      %v529 = vsel %vm526, %v522, %v525
      %530 = vrot.lane.b32.xlu0 %v488, 127
      %v531 = vpop.permute.xlu0 %530
      %532 = vrot.lane.b32.xlu0 %v489, 127
      %v533 = vpop.permute.xlu0 %532
      %vm534 = vcmask 1039360
      %v535 = vsel %vm534, %v531, %v533
      %v538 = vsel %vm534, %v533, %v531
      %539 = vrot.lane.b32.xlu0 %v488, 113
      %v540 = vpop.permute.xlu0 %539
      %541 = vrot.lane.b32.xlu0 %v489, 113
      %v542 = vpop.permute.xlu0 %541
      %vm543 = vcmask 924672
      %v544 = vsel %vm543, %v540, %v542
      %v548 = vsel %vm543, %v542, %v540
      %549 = vrot.lane.b32.xlu0 %v488, 112
      %v550 = vpop.permute.xlu0 %549
      %551 = vrot.lane.b32.xlu0 %v489, 112
      %v552 = vpop.permute.xlu0 %551
      %vm553 = vcmask 916480
      %v554 = vsel %vm553, %v550, %v552
      %v557 = vsel %vm553, %v552, %v550
      %558 = vrot.lane.b32.xlu0 %v488, 111
      %v559 = vpop.permute.xlu0 %558
      %560 = vrot.lane.b32.xlu0 %v489, 111
      %v561 = vpop.permute.xlu0 %560
      %vm562 = vcmask 908288
      %v563 = vsel %vm562, %v559, %v561
      %v567 = vsel %vm562, %v561, %v559
      %v569 = vrot.slane %v510, 4
      %v570 = vrot.slane %v508, 4
      %v574 = vrot.slane %v529, 4
      %v575 = vrot.slane %v527, 4
      %v579 = vrot.slane %v535, 4
      %v580 = vrot.slane %v538, 4
      %v584 = vrot.slane %v554, 4
      %v585 = vrot.slane %v557, 4
      %vm588 = vcmask 1043456
      %v589 = vsel %vm588, %v501, %v569
      %v590 = vsel %vm588, %v498, %v570
      %v591 = vsel %vm588, %v520, %v574
      %v592 = vsel %vm588, %v517, %v575
      %v593 = vsel %vm588, %v488, %v579
      %v594 = vsel %vm588, %v489, %v580
      %v595 = vsel %vm588, %v544, %v584
      %v596 = vsel %vm588, %v548, %v585
      %v597 = vld [vmem:[%s1] sm:$0xff]
      %v598 = vld [vmem:[%s1 + $0x8] sm:$0xff]
      %v599 = vld [vmem:[%s1 + $0x10] sm:$0xff]
      %v600 = vld [vmem:[%s1 + $0x18] sm:$0xff]
      %v601 = vld [vmem:[%s1 + $0x20] sm:$0xff]
      %v602 = vld [vmem:[%s1 + $0x28] sm:$0xff]
      %v603 = vld [vmem:[%s1 + $0x30] sm:$0xff]
      %v604 = vld [vmem:[%s1 + $0x38] sm:$0xff]
      %v605 = vld [vmem:[%s1 + $0x40] sm:$0xf]
      %v606 = vld [vmem:[%s1 + $0x48] sm:$0xf]
      %v607 = vmul.f32 %v589, %v597
      %v608 = vmul.f32 %v590, %v598
      %v609 = vmul.f32 %v591, %v599
      %v610 = vmul.f32 %v592, %v600
      %v611 = vmul.f32 %v593, %v601
      %v612 = vmul.f32 %v594, %v602
      %v613 = vmul.f32 %v595, %v603
      %v614 = vmul.f32 %v596, %v604
      %v615 = vmul.f32 %v563, %v605
      %v616 = vmul.f32 %v567, %v606
      %v617 = vld [vmem:[%s4] sm:$0xf]
      %v618 = vld [vmem:[%s5] sm:$0xf]
      %620 = vset.pattern.permute.xlu0 0
      %621 = vperm.xlu0 %620, %v618
      %v622 = vpop.permute.xlu0 %621
      %vm624 = vcmask 293888
      %v626 = vsel %vm624, %v617, 0
      %v629 = vsel %vm588, %v615, 0
      %v632 = vsel %vm588, %v616, 0
      %634 = vmatprep.subr.mxu0 %v608
      %635 = vmatpush1.msra.mxu0 %v607
      %636 = vmatprep.subr.mxu0 %v610
      %637 = vmatpush1.msra.mxu0 %v609
      %638 = vmatprep.subr.mxu0 %v612
      %639 = vmatpush1.msra.mxu0 %v611
      %640 = vmatprep.subr.mxu0 %v614
      %641 = vmatpush1.msra.mxu0 %v613
      %642 = vmatprep.subr.mxu0 %v632
      %643 = vmatpush1.msra.mxu0 %v629
      %644 = vmatprep.subr.mxu0 0.0
      %645 = vmatpush1.msra.mxu0 0.0
      %646 = vmatprep.subr.mxu0 0.0
      %647 = vmatpush1.msra.mxu0 0.0
      %648 = vmatprep.subr.mxu0 0.0
      %649 = vmatpush1.msra.mxu0 0.0
      %650 = vmatprep.subr.mxu0 0.0
      %651 = vmatpush1.msra.mxu0 0.0
      %652 = vmatprep.subr.mxu0 0.0
      %653 = vmatpush1.msra.mxu0 0.0
      %654 = vmatprep.subr.mxu0 0.0
      %655 = vmatpush1.msra.mxu0 0.0
      %656 = vmatprep.subr.mxu0 0.0
      %657 = vmatpush1.msra.mxu0 0.0
      %658 = vmatprep.subr.mxu0 0.0
      %659 = vmatpush1.msra.mxu0 0.0
      %660 = vmatprep.subr.mxu0 0.0
      %661 = vmatpush1.msra.mxu0 0.0
      %662 = vmatprep.subr.mxu0 0.0
      %663 = vmatpush1.msra.mxu0 0.0
      %664 = vmatprep.subr.mxu0 0.0
      %665 = vmatpush1.msra.mxu0 0.0
      %666 = vmatprep.subr.mxu0 0.0
      %667 = vmatpush1.msra.mxu0 0.0
      %668 = vmatprep.subr.mxu0 0.0
      %669 = vmatpush1.msra.mxu0 0.0
      %670 = vmatprep.subr.mxu0 0.0
      %671 = vmatpush1.msra.mxu0 0.0
      %672 = vmatprep.subr.mxu0 0.0
      %673 = vmatpush1.msra.mxu0 0.0
      %674 = vmatprep.subr.mxu0 0.0
      %675 = vmatpush1.msra.mxu0 0.0
      %676 = vmatprep.subr.mxu0 0.0
      %677 = vmatpush1.msra.mxu0 0.0
      %678 = vmatprep.subr.mxu0 0.0
      %679 = vmatpush1.msra.mxu0 0.0
      %680 = vmatprep.subr.mxu0 0.0
      %681 = vmatpush1.msra.mxu0 0.0
      %682 = vmatprep.subr.mxu0 0.0
      %683 = vmatpush1.msra.mxu0 0.0
      %684 = vmatprep.subr.mxu0 0.0
      %685 = vmatpush1.msra.mxu0 0.0
      %686 = vmatprep.subr.mxu0 0.0
      %687 = vmatpush1.msra.mxu0 0.0
      %688 = vmatprep.subr.mxu0 0.0
      %689 = vmatpush1.msra.mxu0 0.0
      %690 = vmatprep.subr.mxu0 0.0
      %691 = vmatpush1.msra.mxu0 0.0
      %692 = vmatprep.subr.mxu0 0.0
      %693 = vmatpush1.msra.mxu0 0.0
      %694 = vmatprep.subr.mxu0 0.0
      %695 = vmatpush1.msra.mxu0 0.0
      %696 = vmatprep.subr.mxu0 0.0
      %697 = vmatpush1.msra.mxu0 0.0
      %698 = vmatprep.mubr.f32.mxu0 0.0
      %699 = vmatmul.mubr.f32.gmra.mrb[0].mxu0 %v626
      %v700 = vpop.f32.mrb[0].mxu0
      %v701 = vadd.f32 %v622, %v700
      %v702 = vpop.f32.mrb[0].mxu0
      %v703 = vadd.f32 %v622, %v702
      %704 = vdwg.mxu0
      %vm705 = vcmp.ge.f32.partialorder %v701, 0.0
      %vm706 = vcmp.ge.f32.partialorder %v703, 0.0
      %v707 = vmul.f32 %v701, 0.1
      %v708 = vmul.f32 %v703, 0.1
      %v709 = vsel %vm705, %v701, %v707
      %v710 = vsel %vm706, %v703, %v708
      %712 = vrot.lane.b32.xlu0 %v710, 17
      %v713 = vpop.permute.xlu0 %712
      %716 = vrot.lane.b32.xlu0 %v709, 17
      %v717 = vpop.permute.xlu0 %716
      %v718 = vsel %vm497, %v717, %v713
      %v721 = vsel %vm497, %v713, %v717
      %722 = vrot.lane.b32.xlu0 %v710, 16
      %v723 = vpop.permute.xlu0 %722
      %725 = vrot.lane.b32.xlu0 %v709, 16
      %v726 = vpop.permute.xlu0 %725
      %v727 = vsel %vm507, %v726, %v723
      %v729 = vsel %vm507, %v723, %v726
      %730 = vrot.lane.b32.xlu0 %v710, 15
      %v731 = vpop.permute.xlu0 %730
      %733 = vrot.lane.b32.xlu0 %v709, 15
      %v734 = vpop.permute.xlu0 %733
      %v735 = vsel %vm516, %v734, %v731
      %v738 = vsel %vm516, %v731, %v734
      %739 = vrot.lane.b32.xlu0 %v710, 1
      %v740 = vpop.permute.xlu0 %739
      %742 = vrot.lane.b32.xlu0 %v709, 1
      %v743 = vpop.permute.xlu0 %742
      %v744 = vsel %vm526, %v743, %v740
      %v746 = vsel %vm526, %v740, %v743
      %747 = vrot.lane.b32.xlu0 %v709, 127
      %v748 = vpop.permute.xlu0 %747
      %749 = vrot.lane.b32.xlu0 %v710, 127
      %v750 = vpop.permute.xlu0 %749
      %v751 = vsel %vm534, %v748, %v750
      %v754 = vsel %vm534, %v750, %v748
      %755 = vrot.lane.b32.xlu0 %v709, 113
      %v756 = vpop.permute.xlu0 %755
      %757 = vrot.lane.b32.xlu0 %v710, 113
      %v758 = vpop.permute.xlu0 %757
      %v759 = vsel %vm543, %v756, %v758
      %v763 = vsel %vm543, %v758, %v756
      %764 = vrot.lane.b32.xlu0 %v709, 112
      %v765 = vpop.permute.xlu0 %764
      %766 = vrot.lane.b32.xlu0 %v710, 112
      %v767 = vpop.permute.xlu0 %766
      %v768 = vsel %vm553, %v765, %v767
      %v771 = vsel %vm553, %v767, %v765
      %772 = vrot.lane.b32.xlu0 %v709, 111
      %v773 = vpop.permute.xlu0 %772
      %774 = vrot.lane.b32.xlu0 %v710, 111
      %v775 = vpop.permute.xlu0 %774
      %v776 = vsel %vm562, %v773, %v775
      %v780 = vsel %vm562, %v775, %v773
      %v782 = vrot.slane %v729, 4
      %v783 = vrot.slane %v727, 4
      %v787 = vrot.slane %v746, 4
      %v788 = vrot.slane %v744, 4
      %v792 = vrot.slane %v751, 4
      %v793 = vrot.slane %v754, 4
      %v797 = vrot.slane %v768, 4
      %v798 = vrot.slane %v771, 4
      %v801 = vsel %vm588, %v721, %v782
      %v802 = vsel %vm588, %v718, %v783
      %v803 = vsel %vm588, %v738, %v787
      %v804 = vsel %vm588, %v735, %v788
      %v805 = vsel %vm588, %v709, %v792
      %v806 = vsel %vm588, %v710, %v793
      %v807 = vsel %vm588, %v759, %v797
      %v808 = vsel %vm588, %v763, %v798
      %v809 = vmul.f32 %v801, %v597
      %v810 = vmul.f32 %v802, %v598
      %v811 = vmul.f32 %v803, %v599
      %v812 = vmul.f32 %v804, %v600
      %v813 = vmul.f32 %v805, %v601
      %v814 = vmul.f32 %v806, %v602
      %v815 = vmul.f32 %v807, %v603
      %v816 = vmul.f32 %v808, %v604
      %v817 = vmul.f32 %v776, %v605
      %v818 = vmul.f32 %v780, %v606
      %v819 = vld [vmem:[%s6] sm:$0xf]
      %v820 = vld [vmem:[%s7] sm:$0xf]
      %822 = vset.pattern.permute.xlu0 0
      %823 = vperm.xlu0 %822, %v820
      %v824 = vpop.permute.xlu0 %823
      %v827 = vsel %vm624, %v819, 0
      %v830 = vsel %vm588, %v817, 0
      %v833 = vsel %vm588, %v818, 0
      %835 = vmatprep.subr.mxu0 %v810
      %836 = vmatpush1.msra.mxu0 %v809
      %837 = vmatprep.subr.mxu0 %v812
      %838 = vmatpush1.msra.mxu0 %v811
      %839 = vmatprep.subr.mxu0 %v814
      %840 = vmatpush1.msra.mxu0 %v813
      %841 = vmatprep.subr.mxu0 %v816
      %842 = vmatpush1.msra.mxu0 %v815
      %843 = vmatprep.subr.mxu0 %v833
      %844 = vmatpush1.msra.mxu0 %v830
      %845 = vmatprep.subr.mxu0 0.0
      %846 = vmatpush1.msra.mxu0 0.0
      %847 = vmatprep.subr.mxu0 0.0
      %848 = vmatpush1.msra.mxu0 0.0
      %849 = vmatprep.subr.mxu0 0.0
      %850 = vmatpush1.msra.mxu0 0.0
      %851 = vmatprep.subr.mxu0 0.0
      %852 = vmatpush1.msra.mxu0 0.0
      %853 = vmatprep.subr.mxu0 0.0
      %854 = vmatpush1.msra.mxu0 0.0
      %855 = vmatprep.subr.mxu0 0.0
      %856 = vmatpush1.msra.mxu0 0.0
      %857 = vmatprep.subr.mxu0 0.0
      %858 = vmatpush1.msra.mxu0 0.0
      %859 = vmatprep.subr.mxu0 0.0
      %860 = vmatpush1.msra.mxu0 0.0
      %861 = vmatprep.subr.mxu0 0.0
      %862 = vmatpush1.msra.mxu0 0.0
      %863 = vmatprep.subr.mxu0 0.0
      %864 = vmatpush1.msra.mxu0 0.0
      %865 = vmatprep.subr.mxu0 0.0
      %866 = vmatpush1.msra.mxu0 0.0
      %867 = vmatprep.subr.mxu0 0.0
      %868 = vmatpush1.msra.mxu0 0.0
      %869 = vmatprep.subr.mxu0 0.0
      %870 = vmatpush1.msra.mxu0 0.0
      %871 = vmatprep.subr.mxu0 0.0
      %872 = vmatpush1.msra.mxu0 0.0
      %873 = vmatprep.subr.mxu0 0.0
      %874 = vmatpush1.msra.mxu0 0.0
      %875 = vmatprep.subr.mxu0 0.0
      %876 = vmatpush1.msra.mxu0 0.0
      %877 = vmatprep.subr.mxu0 0.0
      %878 = vmatpush1.msra.mxu0 0.0
      %879 = vmatprep.subr.mxu0 0.0
      %880 = vmatpush1.msra.mxu0 0.0
      %881 = vmatprep.subr.mxu0 0.0
      %882 = vmatpush1.msra.mxu0 0.0
      %883 = vmatprep.subr.mxu0 0.0
      %884 = vmatpush1.msra.mxu0 0.0
      %885 = vmatprep.subr.mxu0 0.0
      %886 = vmatpush1.msra.mxu0 0.0
      %887 = vmatprep.subr.mxu0 0.0
      %888 = vmatpush1.msra.mxu0 0.0
      %889 = vmatprep.subr.mxu0 0.0
      %890 = vmatpush1.msra.mxu0 0.0
      %891 = vmatprep.subr.mxu0 0.0
      %892 = vmatpush1.msra.mxu0 0.0
      %893 = vmatprep.subr.mxu0 0.0
      %894 = vmatpush1.msra.mxu0 0.0
      %895 = vmatprep.subr.mxu0 0.0
      %896 = vmatpush1.msra.mxu0 0.0
      %897 = vmatprep.subr.mxu0 0.0
      %898 = vmatpush1.msra.mxu0 0.0
      %899 = vmatprep.mubr.f32.mxu0 0.0
      %900 = vmatmul.mubr.f32.gmra.mrb[0].mxu0 %v827
      %v901 = vpop.f32.mrb[0].mxu0
      %v902 = vadd.f32 %v824, %v901
      %v903 = vpop.f32.mrb[0].mxu0
      %v904 = vadd.f32 %v824, %v903
      %905 = vdwg.mxu0
      %vm906 = vcmp.ge.f32.partialorder %v902, 0.0
      %vm907 = vcmp.ge.f32.partialorder %v904, 0.0
      %v908 = vmul.f32 %v902, 0.1
      %v909 = vmul.f32 %v904, 0.1
      %v910 = vsel %vm906, %v902, %v908
      %v911 = vsel %vm907, %v904, %v909
      %v914 = vcombine.low %v910, %v911
      %916 = vst [vmem:[%s394] sm:$0xff] %v914
      %v917 = vld [vmem:[%s8] sm:$0xff]
      %v918 = vld [vmem:[%s9] sm:$0xff]
      %920 = vset.pattern.permute.xlu0 0
      %921 = vperm.xlu0 %920, %v918
      %v922 = vpop.permute.xlu0 %921
      %vm924 = vcmask 31744
      %v926 = vsel %vm924, %v917, 0
      %v928 = vsel %vm588, %v910, 0
      %v930 = vsel %vm588, %v911, 0
      %932 = vmatprep.subr.mxu0 %v930
      %933 = vmatpush1.msra.mxu0 %v928
      %934 = vmatprep.subr.mxu0 0.0
      %935 = vmatpush1.msra.mxu0 0.0
      %936 = vmatprep.subr.mxu0 0.0
      %937 = vmatpush1.msra.mxu0 0.0
      %938 = vmatprep.subr.mxu0 0.0
      %939 = vmatpush1.msra.mxu0 0.0
      %940 = vmatprep.subr.mxu0 0.0
      %941 = vmatpush1.msra.mxu0 0.0
      %942 = vmatprep.subr.mxu0 0.0
      %943 = vmatpush1.msra.mxu0 0.0
      %944 = vmatprep.subr.mxu0 0.0
      %945 = vmatpush1.msra.mxu0 0.0
      %946 = vmatprep.subr.mxu0 0.0
      %947 = vmatpush1.msra.mxu0 0.0
      %948 = vmatprep.subr.mxu0 0.0
      %949 = vmatpush1.msra.mxu0 0.0
      %950 = vmatprep.subr.mxu0 0.0
      %951 = vmatpush1.msra.mxu0 0.0
      %952 = vmatprep.subr.mxu0 0.0
      %953 = vmatpush1.msra.mxu0 0.0
      %954 = vmatprep.subr.mxu0 0.0
      %955 = vmatpush1.msra.mxu0 0.0
      %956 = vmatprep.subr.mxu0 0.0
      %957 = vmatpush1.msra.mxu0 0.0
      %958 = vmatprep.subr.mxu0 0.0
      %959 = vmatpush1.msra.mxu0 0.0
      %960 = vmatprep.subr.mxu0 0.0
      %961 = vmatpush1.msra.mxu0 0.0
      %962 = vmatprep.subr.mxu0 0.0
      %963 = vmatpush1.msra.mxu0 0.0
      %964 = vmatprep.subr.mxu0 0.0
      %965 = vmatpush1.msra.mxu0 0.0
      %966 = vmatprep.subr.mxu0 0.0
      %967 = vmatpush1.msra.mxu0 0.0
      %968 = vmatprep.subr.mxu0 0.0
      %969 = vmatpush1.msra.mxu0 0.0
      %970 = vmatprep.subr.mxu0 0.0
      %971 = vmatpush1.msra.mxu0 0.0
      %972 = vmatprep.subr.mxu0 0.0
      %973 = vmatpush1.msra.mxu0 0.0
      %974 = vmatprep.subr.mxu0 0.0
      %975 = vmatpush1.msra.mxu0 0.0
      %976 = vmatprep.subr.mxu0 0.0
      %977 = vmatpush1.msra.mxu0 0.0
      %978 = vmatprep.subr.mxu0 0.0
      %979 = vmatpush1.msra.mxu0 0.0
      %980 = vmatprep.subr.mxu0 0.0
      %981 = vmatpush1.msra.mxu0 0.0
      %982 = vmatprep.subr.mxu0 0.0
      %983 = vmatpush1.msra.mxu0 0.0
      %984 = vmatprep.subr.mxu0 0.0
      %985 = vmatpush1.msra.mxu0 0.0
      %986 = vmatprep.subr.mxu0 0.0
      %987 = vmatpush1.msra.mxu0 0.0
      %988 = vmatprep.subr.mxu0 0.0
      %989 = vmatpush1.msra.mxu0 0.0
      %990 = vmatprep.subr.mxu0 0.0
      %991 = vmatpush1.msra.mxu0 0.0
      %992 = vmatprep.subr.mxu0 0.0
      %993 = vmatpush1.msra.mxu0 0.0
      %994 = vmatprep.subr.mxu0 0.0
      %995 = vmatpush1.msra.mxu0 0.0
      %996 = vmatprep.mubr.f32.mxu0 0.0
      %997 = vmatmul.mubr.f32.gmra.mrb[0].mxu0 %v926
      %v998 = vpop.f32.mrb[0].mxu0
      %v999 = vadd.f32 %v922, %v998
      %v1000 = vpop.f32.mrb[0].mxu0
      %v1001 = vadd.f32 %v922, %v1000
      %1002 = vdwg.mxu0
      %vm1003 = vcmp.ge.f32.partialorder %v999, 0.0
      %vm1004 = vcmp.ge.f32.partialorder %v1001, 0.0
      %v1005 = vmul.f32 %v999, 0.1
      %v1006 = vmul.f32 %v1001, 0.1
      %v1007 = vsel %vm1003, %v999, %v1005
      %v1008 = vsel %vm1004, %v1001, %v1006
      %1009 = vst [vmem:[%s399] sm:$0xff] %v1007
      %1010 = vst [vmem:[%s399 + $0x8] sm:$0xff] %v1008
      %p1011 = scmp.lt.s32.totalorder %s23, 1
      %s1012 = scalar_select %p1011, %s23, 1
      %s1013 = smul.addr %s1012, 2
      %s1014 = smul.addr %s1013, 4
      %s1015 = scalar_lea.vmem %s10, %s1014
      %p1016 = scmp.lt.s32.totalorder %s23, 1
      %s1017 = scalar_select %p1016, %s23, 1
      %s1018 = smul.addr %s1017, 2
      %s1019 = smul.addr %s1018, 8
      %s1020 = scalar_lea.vmem %s11, %s1019
      // Predicated region
      $region61: #{decoder_forward.1} parent=59 // pred_check
        %p1021 = pneg %p256
      $region62: #{decoder_forward.1} parent=59 // pred_check_branch
        %1023 = sbr.rel (%p1021) target = $region64
      $region63: #{decoder_forward.1} parent=59 // pred_region
        _
      $region64: #{decoder_forward.1} parent=59 // pred_fallthru
        _
      // Predicated region
      $region65: #{decoder_forward.1} parent=59 // pred_check
        %p1024 = pneg %p282
      $region66: #{decoder_forward.1} parent=59 // pred_check_branch
        %1026 = sbr.rel (%p1024) target = $region68
      $region67: #{decoder_forward.1} parent=59 // pred_region
        _
      $region68: #{decoder_forward.1} parent=59 // pred_fallthru
        _
    $region60: #{decoder_forward.1} parent=5 // pred_fallthru
      _
    %p1027 = scmp.le.s32.totalorder 2, %s18
    // Predicated region
    $region69: #{decoder_forward.1} parent=5 // pred_check
      %p1028 = pneg %p1027
    $region70: #{decoder_forward.1} parent=5 // pred_check_branch
      %1030 = sbr.rel (%p1028) target = $region72
    $region71: #{decoder_forward.1} parent=5 // pred_region
      %s1031 = ssub.s32 %s18, 2
      // Predicated region
      $region73: #{decoder_forward.1} parent=71 // pred_check
        %p1032 = pneg %p262
      $region74: #{decoder_forward.1} parent=71 // pred_check_branch
        %1034 = sbr.rel (%p1032) target = $region76
      $region75: #{decoder_forward.1} parent=71 // pred_region
        %p1035 = scmp.lt.s32.totalorder %s24, 1
        %s1036 = scalar_select %p1035, %s24, 1
        %s1037 = smul.addr %s1036, 2
        %s1038 = smul.addr %s1037, 4
        %s1039 = scalar_lea.vmem %s10, %s1038
      $region76: #{decoder_forward.1} parent=71 // pred_fallthru
        _
      // Predicated region
      $region77: #{decoder_forward.1} parent=71 // pred_check
        %p1040 = pneg %p288
      $region78: #{decoder_forward.1} parent=71 // pred_check_branch
        %1042 = sbr.rel (%p1040) target = $region80
      $region79: #{decoder_forward.1} parent=71 // pred_region
        %p1043 = scmp.lt.s32.totalorder %s24, 1
        %s1044 = scalar_select %p1043, %s24, 1
        %s1045 = smul.addr %s1044, 2
        %s1046 = smul.addr %s1045, 8
        %s1047 = scalar_lea.vmem %s11, %s1046
      $region80: #{decoder_forward.1} parent=71 // pred_fallthru
        _
    $region72: #{decoder_forward.1} parent=5 // pred_fallthru
      _
  $region6: #{decoder_forward.1} parent=0 // loop_footer
    %s22 = sadd.s32 1, %s18
  $region7: #{decoder_forward.1} parent=0 // loop_footer_branch
    %17 = sbr.rel target = $region3
  $region8: #{decoder_forward.1} parent=0 // loop_exit
    _

</llo_original>
